<compile_context>
chip_gen: v6e
topology: v6e:2x2x1
jax: 0.10.0
libtpu: 0.0.40
codegen_flags: <defaults>
</compile_context>

<pallas_src>
import functools
import math

import jax
import jax.numpy as jnp
from jax.experimental import pallas as pl
from jax.experimental.pallas import tpu as pltpu


_TARGET_BLOCK_BYTES = 2 * 1024 * 1024  # ~2 MiB per block; in+out double-buffered ~8 MiB VMEM


def _reverse_groups_pow2(x, w: int):
    """Reverse each contiguous group of `w` lanes along the last axis.

    Requires w to be a power of two.  out[..., j] = x[..., j XOR (w-1)]
    within each w-wide group, realized as log2(w) roll+select stages.
    """
    lane_idx = jax.lax.broadcasted_iota(jnp.int32, x.shape, dimension=x.ndim - 1)
    out = x
    b = 1
    while b < w:
        hi = (lane_idx & b) != 0
        # bit b set   -> source index j - b  (= roll by +b)
        # bit b clear -> source index j + b  (= roll by -b)
        out = jnp.where(hi,
                        jnp.roll(out, b, axis=-1),
                        jnp.roll(out, -b, axis=-1))
        b *= 2
    return out


def _hflip_pow2_kernel(x_ref, o_ref, *, w: int):
    # x_ref / o_ref: (TM, k*W) with k*W a multiple of 128 when packing applies.
    o_ref[...] = _reverse_groups_pow2(x_ref[...], w)


def _hflip_generic_kernel(x_ref, o_ref):
    # Fallback for non-power-of-two widths: plain lane reversal of the block.
    # (Relies on lax.rev lowering; not exercised by the test below.)
    o_ref[...] = jnp.flip(x_ref[...], axis=-1)


def horizontal_flip(img: jax.Array, flip: bool = True) -> jax.Array:
    """Pallas implementation of HorizontalFlip.forward for NCHW tensors."""
    if not flip:
        return img

    N, C, H, W = img.shape
    if W <= 1:
        return img  # flipping a width-1 image is the identity

    M = N * C * H
    itemsize = jnp.dtype(img.dtype).itemsize
    w_is_pow2 = (W & (W - 1)) == 0

    # Pack k image rows per kernel row so the lane (last) dim is a multiple of
    # 128 whenever possible -> lane-dense blocks.
    k = 128 // math.gcd(W, 128)
    if not (w_is_pow2 and M % k == 0):
        k = 1

    rows = M // k
    lane = k * W
    x2d = img.reshape(rows, lane)  # free: contiguous row-major reshape

    # ~2 MiB blocks; row count a multiple of 8 (sublane), or the full extent.
    tm = max(8, (_TARGET_BLOCK_BYTES // (lane * itemsize)) // 8 * 8)
    if tm >= rows:
        tm = rows
    grid = (pl.cdiv(rows, tm),)

    if w_is_pow2:
        kernel = functools.partial(_hflip_pow2_kernel, w=W)
    else:
        kernel = _hflip_generic_kernel

    out2d = pl.pallas_call(
        kernel,
        out_shape=jax.ShapeDtypeStruct((rows, lane), img.dtype),
        grid=grid,
        in_specs=[pl.BlockSpec((tm, lane), lambda i: (i, 0))],
        out_specs=pl.BlockSpec((tm, lane), lambda i: (i, 0)),
        compiler_params=pltpu.CompilerParams(
            dimension_semantics=("parallel",),
        ),
        cost_estimate=pl.CostEstimate(
            flops=0,
            transcendentals=0,
            bytes_accessed=2 * M * W * itemsize,
        ),
    )(x2d)

    return out2d.reshape(N, C, H, W)


if __name__ == "__main__":
    key = jax.random.PRNGKey(0)
    x = jax.random.normal(key, (2, 4, 16, 16), dtype=jnp.float32)

    out = jax.block_until_ready(horizontal_flip(x, flip=True))
    ref = jnp.flip(x, axis=-1)
    assert out.shape == x.shape and out.dtype == x.dtype
    assert bool(jnp.array_equal(out, ref))

    # Shape generality: row count not a multiple of 8 / not a power of two.
    x2 = jax.random.normal(jax.random.PRNGKey(1), (2, 3, 36, 16), dtype=jnp.float32)
    out2 = jax.block_until_ready(horizontal_flip(x2, flip=True))
    assert bool(jnp.array_equal(out2, jnp.flip(x2, axis=-1)))

    # flip=False path is the identity.
    assert bool(jnp.array_equal(horizontal_flip(x, flip=False), x))

    print("KERNEL_OK")
</pallas_src>

<mosaic_0001>
module attributes {stable_mosaic.version = 11 : i64} {
  func.func @_hflip_pow2_kernel(%arg0: i32, %arg1: memref<16x128xf32, #tpu.memory_space<vmem>>, %arg2: memref<16x128xf32, #tpu.memory_space<vmem>>) attributes {dimension_semantics = [#tpu.dimension_semantics<parallel>], iteration_bounds = array<i64: 1>, scalar_prefetch = 0 : i64, scratch_operands = 0 : i64, tpu.core_type = #tpu.core_type<tc>, window_params = [{transform_indices = @transform_0, window_bounds = array<i64: 16, 128>}, {transform_indices = @transform_1, window_bounds = array<i64: 16, 128>}]} {
    %c0 = arith.constant 0 : index
    %c0_0 = arith.constant 0 : index
    %0 = vector.load %arg1[%c0, %c0_0] : memref<16x128xf32, #tpu.memory_space<vmem>>, vector<16x128xf32>
    %1 = tpu.iota {dimensions = array<i32: 1>} : vector<16x128xi32>
    %c1_i32 = arith.constant 1 : i32
    %2 = vector.broadcast %c1_i32 : i32 to vector<16x128xi32>
    %3 = arith.andi %1, %2 : vector<16x128xi32>
    %c0_i32 = arith.constant 0 : i32
    %4 = vector.broadcast %c0_i32 : i32 to vector<16x128xi32>
    %5 = arith.cmpi ne, %3, %4 : vector<16x128xi32>
    %6 = vector.extract_strided_slice %0 {offsets = [0, 127], sizes = [16, 1], strides = [1, 1]} : vector<16x128xf32> to vector<16x1xf32>
    %7 = vector.extract_strided_slice %0 {offsets = [0, 0], sizes = [16, 127], strides = [1, 1]} : vector<16x128xf32> to vector<16x127xf32>
    %8 = tpu.concatenate %6, %7 in 1 : vector<16x1xf32>, vector<16x127xf32> -> vector<16x128xf32>
    %9 = vector.extract_strided_slice %0 {offsets = [0, 1], sizes = [16, 127], strides = [1, 1]} : vector<16x128xf32> to vector<16x127xf32>
    %10 = vector.extract_strided_slice %0 {offsets = [0, 0], sizes = [16, 1], strides = [1, 1]} : vector<16x128xf32> to vector<16x1xf32>
    %11 = tpu.concatenate %9, %10 in 1 : vector<16x127xf32>, vector<16x1xf32> -> vector<16x128xf32>
    %12 = arith.select %5, %8, %11 : vector<16x128xi1>, vector<16x128xf32>
    %c2_i32 = arith.constant 2 : i32
    %13 = vector.broadcast %c2_i32 : i32 to vector<16x128xi32>
    %14 = arith.andi %1, %13 : vector<16x128xi32>
    %c0_i32_1 = arith.constant 0 : i32
    %15 = vector.broadcast %c0_i32_1 : i32 to vector<16x128xi32>
    %16 = arith.cmpi ne, %14, %15 : vector<16x128xi32>
    %17 = vector.extract_strided_slice %12 {offsets = [0, 126], sizes = [16, 2], strides = [1, 1]} : vector<16x128xf32> to vector<16x2xf32>
    %18 = vector.extract_strided_slice %12 {offsets = [0, 0], sizes = [16, 126], strides = [1, 1]} : vector<16x128xf32> to vector<16x126xf32>
    %19 = tpu.concatenate %17, %18 in 1 : vector<16x2xf32>, vector<16x126xf32> -> vector<16x128xf32>
    %20 = vector.extract_strided_slice %12 {offsets = [0, 2], sizes = [16, 126], strides = [1, 1]} : vector<16x128xf32> to vector<16x126xf32>
    %21 = vector.extract_strided_slice %12 {offsets = [0, 0], sizes = [16, 2], strides = [1, 1]} : vector<16x128xf32> to vector<16x2xf32>
    %22 = tpu.concatenate %20, %21 in 1 : vector<16x126xf32>, vector<16x2xf32> -> vector<16x128xf32>
    %23 = arith.select %16, %19, %22 : vector<16x128xi1>, vector<16x128xf32>
    %c4_i32 = arith.constant 4 : i32
    %24 = vector.broadcast %c4_i32 : i32 to vector<16x128xi32>
    %25 = arith.andi %1, %24 : vector<16x128xi32>
    %c0_i32_2 = arith.constant 0 : i32
    %26 = vector.broadcast %c0_i32_2 : i32 to vector<16x128xi32>
    %27 = arith.cmpi ne, %25, %26 : vector<16x128xi32>
    %28 = vector.extract_strided_slice %23 {offsets = [0, 124], sizes = [16, 4], strides = [1, 1]} : vector<16x128xf32> to vector<16x4xf32>
    %29 = vector.extract_strided_slice %23 {offsets = [0, 0], sizes = [16, 124], strides = [1, 1]} : vector<16x128xf32> to vector<16x124xf32>
    %30 = tpu.concatenate %28, %29 in 1 : vector<16x4xf32>, vector<16x124xf32> -> vector<16x128xf32>
    %31 = vector.extract_strided_slice %23 {offsets = [0, 4], sizes = [16, 124], strides = [1, 1]} : vector<16x128xf32> to vector<16x124xf32>
    %32 = vector.extract_strided_slice %23 {offsets = [0, 0], sizes = [16, 4], strides = [1, 1]} : vector<16x128xf32> to vector<16x4xf32>
    %33 = tpu.concatenate %31, %32 in 1 : vector<16x124xf32>, vector<16x4xf32> -> vector<16x128xf32>
    %34 = arith.select %27, %30, %33 : vector<16x128xi1>, vector<16x128xf32>
    %c8_i32 = arith.constant 8 : i32
    %35 = vector.broadcast %c8_i32 : i32 to vector<16x128xi32>
    %36 = arith.andi %1, %35 : vector<16x128xi32>
    %c0_i32_3 = arith.constant 0 : i32
    %37 = vector.broadcast %c0_i32_3 : i32 to vector<16x128xi32>
    %38 = arith.cmpi ne, %36, %37 : vector<16x128xi32>
    %39 = vector.extract_strided_slice %34 {offsets = [0, 120], sizes = [16, 8], strides = [1, 1]} : vector<16x128xf32> to vector<16x8xf32>
    %40 = vector.extract_strided_slice %34 {offsets = [0, 0], sizes = [16, 120], strides = [1, 1]} : vector<16x128xf32> to vector<16x120xf32>
    %41 = tpu.concatenate %39, %40 in 1 : vector<16x8xf32>, vector<16x120xf32> -> vector<16x128xf32>
    %42 = vector.extract_strided_slice %34 {offsets = [0, 8], sizes = [16, 120], strides = [1, 1]} : vector<16x128xf32> to vector<16x120xf32>
    %43 = vector.extract_strided_slice %34 {offsets = [0, 0], sizes = [16, 8], strides = [1, 1]} : vector<16x128xf32> to vector<16x8xf32>
    %44 = tpu.concatenate %42, %43 in 1 : vector<16x120xf32>, vector<16x8xf32> -> vector<16x128xf32>
    %45 = arith.select %38, %41, %44 : vector<16x128xi1>, vector<16x128xf32>
    %c0_4 = arith.constant 0 : index
    %c0_5 = arith.constant 0 : index
    %46 = vector.load %arg2[%c0_4, %c0_5] : memref<16x128xf32, #tpu.memory_space<vmem>>, vector<16x128xf32>
    tpu.vector_store %arg2[%c0_4, %c0_5], %45 {strides = array<i32>} : memref<16x128xf32, #tpu.memory_space<vmem>>, vector<16x128xf32>,
    return
  }
  func.func @transform_0(%arg0: i32) -> (i32, i32) {
    %c0_i32 = arith.constant 0 : i32
    %c0_i32_0 = arith.constant 0 : i32
    return %arg0, %c0_i32 : i32, i32
  }
  func.func @transform_1(%arg0: i32) -> (i32, i32) {
    %c0_i32 = arith.constant 0 : i32
    %c0_i32_0 = arith.constant 0 : i32
    return %arg0, %c0_i32 : i32, i32
  }
}

</mosaic_0001>

<llo_original>
// kernel: tpu_custom_call.1
$region0: #{tpu_custom_call.1}
  #allocation0 [shape = 'u32[]', space=smem, size = 0x4, offset = 0x4, fixed_abs, tag = 'smem constant byte address 0x4 - core index']
  #allocation1 [shape = 'u32[144,128]{1,0:T(1,128)}', space=vmem, size = 0x12000, scoped, tag = 'internal scratch']
  %s0 = inlined_call_operand.hbm [shape: f32[16,128], index: 0, kind: input, shape index: {}]
  %s1 = inlined_call_operand.hbm [shape: f32[16,128], index: 1, kind: output, shape index: {}]
  %s2 = sld [smem:[#allocation0]]
  $region18: #{tpu_custom_call.1} parent=0
    _
  %s4 = ssub.s32 1, %s2
  %s5 = scalar_select 0, %s4, %s2
  $region1: #{tpu_custom_call.1} parent=0
    #allocation2 [shape = 'u8[8192]{0}', space=vmem, size = 0x2000, scoped, tag = 'input window, operand 0, single buffered']
    #allocation3 [shape = 's32[1]{0}', space=sflag, size = 0x4, scoped, tag = 'scoped memory for tpu_custom_call.1']
    #allocation4 [shape = 's32[1]{0}', space=sflag, size = 0x4, scoped, tag = 'scoped memory for tpu_custom_call.1']
    #allocation5 [shape = 'u8[8192]{0}', space=vmem, size = 0x2000, scoped, tag = 'output window, operand 0, single buffered']
    %6 = vsyncpa [#allocation3], 0
    %7 = vsyncpa [#allocation4], 0
    // Predicated region
    $region2: #{tpu_custom_call.1} parent=1 // pred_check
      _
    $region3: #{tpu_custom_call.1} parent=1 // pred_check_branch
      %9 = sbr.rel (0) target = $region5
    $region4: #{tpu_custom_call.1} parent=1 // pred_region
      %s11 = ssub.s32 256, 256
      %12 = vsyncadd [#allocation3], %s11
      %s13 = sshll.u32 [#allocation2], 4
      %s14 = int_to_ptr.vmem [resolvable:$true] %s13
      %19 = dma.hbm_to_vmem [thread:$0]  %s0, 256, %s14, [#allocation3], 128, 128, 8
    $region5: #{tpu_custom_call.1} parent=1 // pred_fallthru
      _
    // Predicated region
    $region6: #{tpu_custom_call.1} parent=1 // pred_check
      _
    $region7: #{tpu_custom_call.1} parent=1 // pred_check_branch
      %21 = sbr.rel (0) target = $region9
    $region8: #{tpu_custom_call.1} parent=1 // pred_region
      %22 = dma.done [#allocation3], 256
    $region9: #{tpu_custom_call.1} parent=1 // pred_fallthru
      _
    %v23 = vld [vmem:[#allocation2] sm:$0xff]
    %v24 = vld [vmem:[#allocation2 + $0x8] sm:$0xff]
    %v25 = vlaneseq
    %v26 = vand.u32 %v25, 127
    %v27 = vand.u32 %v26, 1
    %vm28 = vcmp.ne.s32.totalorder %v27, 0
    %31 = vrot.lane.b32.xlu0 %v23, 1
    %v32 = vpop.permute.xlu0 %31
    %33 = vrot.lane.b32.xlu0 %v24, 1
    %v34 = vpop.permute.xlu0 %33
    %37 = vrot.lane.b32.xlu0 %v23, 127
    %v38 = vpop.permute.xlu0 %37
    %39 = vrot.lane.b32.xlu0 %v24, 127
    %v40 = vpop.permute.xlu0 %39
    %v43 = vsel %vm28, %v32, %v38
    %v44 = vsel %vm28, %v34, %v40
    %v45 = vand.u32 %v26, 2
    %vm46 = vcmp.ne.s32.totalorder %v45, 0
    %49 = vrot.lane.b32.xlu0 %v43, 2
    %v50 = vpop.permute.xlu0 %49
    %51 = vrot.lane.b32.xlu0 %v44, 2
    %v52 = vpop.permute.xlu0 %51
    %55 = vrot.lane.b32.xlu0 %v43, 126
    %v56 = vpop.permute.xlu0 %55
    %57 = vrot.lane.b32.xlu0 %v44, 126
    %v58 = vpop.permute.xlu0 %57
    %v61 = vsel %vm46, %v50, %v56
    %v62 = vsel %vm46, %v52, %v58
    %v63 = vand.u32 %v26, 4
    %vm64 = vcmp.ne.s32.totalorder %v63, 0
    %67 = vrot.lane.b32.xlu0 %v61, 4
    %v68 = vpop.permute.xlu0 %67
    %69 = vrot.lane.b32.xlu0 %v62, 4
    %v70 = vpop.permute.xlu0 %69
    %73 = vrot.lane.b32.xlu0 %v61, 124
    %v74 = vpop.permute.xlu0 %73
    %75 = vrot.lane.b32.xlu0 %v62, 124
    %v76 = vpop.permute.xlu0 %75
    %v79 = vsel %vm64, %v68, %v74
    %v80 = vsel %vm64, %v70, %v76
    %v81 = vand.u32 %v26, 8
    %vm82 = vcmp.ne.s32.totalorder %v81, 0
    %85 = vrot.lane.b32.xlu0 %v79, 8
    %v86 = vpop.permute.xlu0 %85
    %87 = vrot.lane.b32.xlu0 %v80, 8
    %v88 = vpop.permute.xlu0 %87
    %91 = vrot.lane.b32.xlu0 %v79, 120
    %v92 = vpop.permute.xlu0 %91
    %93 = vrot.lane.b32.xlu0 %v80, 120
    %v94 = vpop.permute.xlu0 %93
    %v97 = vsel %vm82, %v86, %v92
    %v98 = vsel %vm82, %v88, %v94
    %99 = vst [vmem:[#allocation5] sm:$0xff] %v97
    %100 = vst [vmem:[#allocation5 + $0x8] sm:$0xff] %v98
    // Predicated region
    $region10: #{tpu_custom_call.1} parent=1 // pred_check
      _
    $region11: #{tpu_custom_call.1} parent=1 // pred_check_branch
      %102 = sbr.rel (0) target = $region13
    $region12: #{tpu_custom_call.1} parent=1 // pred_region
      %s104 = ssub.s32 256, 256
      %105 = vsyncadd [#allocation4], %s104
      %s106 = sshll.u32 [#allocation5], 4
      %s107 = int_to_ptr.vmem [resolvable:$true] %s106
      %112 = dma.vmem_to_hbm [thread:$0]  %s107, 256, %s1, [#allocation4], 128, 128, 8
    $region13: #{tpu_custom_call.1} parent=1 // pred_fallthru
      _
    // Predicated region
    $region14: #{tpu_custom_call.1} parent=1 // pred_check
      _
    $region15: #{tpu_custom_call.1} parent=1 // pred_check_branch
      %114 = sbr.rel (0) target = $region17
    $region16: #{tpu_custom_call.1} parent=1 // pred_region
      %115 = dma.done [#allocation4], 256
    $region17: #{tpu_custom_call.1} parent=1 // pred_fallthru
      _
    %116 = vsyncpa [#allocation3], 1
    %117 = vsyncpa [#allocation4], 1

</llo_original>
